<compile_context>
chip_gen: v7x
topology: tpu7x:2x2x1
jax: 0.10.0
libtpu: 0.0.40
codegen_flags: <defaults>
</compile_context>

<pallas_src>
import jax
import jax.numpy as jnp
from jax.experimental import pallas as pl
from jax.experimental.pallas import tpu as pltpu

_LANE = 128
_SUBLANE = 8


def concat_table_fused_kernel(x_ref, w_ref, b_ref, o_ref):
    # One grid step: (TM, 512) @ (512, N_pad) + bias -> lane-dense (TM, N_pad) store.
    acc = jnp.dot(x_ref[...], w_ref[...], preferred_element_type=jnp.float32)
    o_ref[...] = (acc + b_ref[...]).astype(o_ref.dtype)


def concat_table(x_nchw, wx_t, bx, wy_t, by, *, tm=256):
    """Forward of ConcatTable. Returns [FC_x(x), FC_y(x)].

    x_nchw : (B, 512, 1, 1) feature (any trailing spatial dims that flatten to 512)
    wx_t   : (512, out_x)  pre-transposed weight of FC_x
    bx     : (out_x,)      bias of FC_x
    wy_t   : (512, out_y)  pre-transposed weight of FC_y
    by     : (out_y,)      bias of FC_y
    """
    B = x_nchw.shape[0]
    in_dim = wx_t.shape[0]            # 512
    out_x = wx_t.shape[1]
    out_y = wy_t.shape[1]
    n_out = out_x + out_y

    # --- glue (plain JAX): flatten input, fuse + lane-pad weights/bias ------------
    x2d = x_nchw.reshape(B, in_dim)

    n_pad = ((n_out + _LANE - 1) // _LANE) * _LANE          # >=128, multiple of 128
    w_fused = jnp.concatenate([wx_t, wy_t], axis=1)          # (512, n_out)
    b_fused = jnp.concatenate([bx, by], axis=0).reshape(1, n_out)
    if n_pad != n_out:
        w_fused = jnp.pad(w_fused, ((0, 0), (0, n_pad - n_out)))
        b_fused = jnp.pad(b_fused, ((0, 0), (0, n_pad - n_out)))

    # --- row tile: sublane-aligned, capped at `tm`, batch zero-padded to fit ------
    tm_eff = min(tm, ((B + _SUBLANE - 1) // _SUBLANE) * _SUBLANE)
    tm_eff = max(_SUBLANE, (tm_eff // _SUBLANE) * _SUBLANE)
    b_pad = ((B + tm_eff - 1) // tm_eff) * tm_eff
    if b_pad != B:
        x2d = jnp.pad(x2d, ((0, b_pad - B), (0, 0)))
    grid = (b_pad // tm_eff,)

    out = pl.pallas_call(
        concat_table_fused_kernel,
        out_shape=jax.ShapeDtypeStruct((b_pad, n_pad), x2d.dtype),
        grid_spec=pltpu.PrefetchScalarGridSpec(
            num_scalar_prefetch=0,
            grid=grid,
            in_specs=[
                pl.BlockSpec((tm_eff, in_dim), lambda i: (i, 0)),   # x tile (streamed)
                pl.BlockSpec((in_dim, n_pad), lambda i: (0, 0)),    # fused W^T (resident)
                pl.BlockSpec((1, n_pad), lambda i: (0, 0)),         # fused bias (resident)
            ],
            out_specs=pl.BlockSpec((tm_eff, n_pad), lambda i: (i, 0)),
        ),
        compiler_params=pltpu.CompilerParams(
            dimension_semantics=("parallel",)),
    )(x2d, w_fused, b_fused)

    # split fused lane-dense output back into the two FC results
    ox = out[:B, :out_x]
    oy = out[:B, out_x:n_out]
    return [ox, oy]


def init_concat_table_params(key, in_dim, out_x, out_y, dtype=jnp.float32):
    """Deterministic params matching nn.Linear(512, out) default init
    (uniform(-1/sqrt(in), 1/sqrt(in)))."""
    kx_w, kx_b, ky_w, ky_b = jax.random.split(key, 4)
    bound = 1.0 / jnp.sqrt(jnp.float32(in_dim))
    # Stored already transposed: (in_dim, out)
    wx_t = jax.random.uniform(kx_w, (in_dim, out_x), dtype, -bound, bound)
    bx = jax.random.uniform(kx_b, (out_x,), dtype, -bound, bound)
    wy_t = jax.random.uniform(ky_w, (in_dim, out_y), dtype, -bound, bound)
    by = jax.random.uniform(ky_b, (out_y,), dtype, -bound, bound)
    return wx_t, bx, wy_t, by


if __name__ == "__main__":
    key = jax.random.PRNGKey(0)
    k_x, k_p = jax.random.split(key)

    B, C, H, W = 8, 512, 1, 1
    out_x, out_y = 32, 16

    x = jax.random.normal(k_x, (B, C, H, W), dtype=jnp.float32)
    wx_t, bx, wy_t, by = init_concat_table_params(k_p, C, out_x, out_y)

    outs = concat_table(x, wx_t, bx, wy_t, by, tm=256)
    outs = jax.block_until_ready(outs)

    # reference check in plain JAX
    x2d = x.reshape(B, C)
    ref_x = x2d @ wx_t + bx
    ref_y = x2d @ wy_t + by
    assert outs[0].shape == ref_x.shape and outs[1].shape == ref_y.shape
    assert jnp.allclose(outs[0], ref_x, atol=1e-4, rtol=1e-4)
    assert jnp.allclose(outs[1], ref_y, atol=1e-4, rtol=1e-4)

    print("KERNEL_OK")
</pallas_src>

<mosaic_0001>
module attributes {stable_mosaic.version = 11 : i64} {
  func.func @concat_table_fused_kernel(%arg0: i32, %arg1: memref<8x512xf32, #tpu.memory_space<vmem>>, %arg2: memref<512x128xf32, #tpu.memory_space<vmem>>, %arg3: memref<1x128xf32, #tpu.memory_space<vmem>>, %arg4: memref<8x128xf32, #tpu.memory_space<vmem>>) attributes {dimension_semantics = [#tpu.dimension_semantics<parallel>], iteration_bounds = array<i64: 1>, scalar_prefetch = 0 : i64, scratch_operands = 0 : i64, tpu.core_type = #tpu.core_type<tc>, window_params = [{transform_indices = @transform_0, window_bounds = array<i64: 8, 512>}, {pipeline_mode = #tpu.pipeline_mode<synchronous>, transform_indices = @transform_1, window_bounds = array<i64: 512, 128>}, {pipeline_mode = #tpu.pipeline_mode<synchronous>, transform_indices = @transform_2, window_bounds = array<i64: 1, 128>}, {transform_indices = @transform_3, window_bounds = array<i64: 8, 128>}]} {
    %c0 = arith.constant 0 : index
    %c0_0 = arith.constant 0 : index
    %0 = vector.load %arg1[%c0, %c0_0] : memref<8x512xf32, #tpu.memory_space<vmem>>, vector<8x512xf32>
    %c0_1 = arith.constant 0 : index
    %c0_2 = arith.constant 0 : index
    %1 = vector.load %arg2[%c0_1, %c0_2] : memref<512x128xf32, #tpu.memory_space<vmem>>, vector<512x128xf32>
    %cst = arith.constant dense<0.000000e+00> : vector<8x128xf32>
    %2 = tpu.matmul %0, %1, %cst {dimension_numbers = #tpu.dot_dimension_numbers<[1], [0], [0], [1], [0, 0, 1, 1], [], []>} : vector<8x512xf32>, vector<512x128xf32>, vector<8x128xf32> -> vector<8x128xf32>
    %c0_3 = arith.constant 0 : index
    %c0_4 = arith.constant 0 : index
    %3 = vector.load %arg3[%c0_3, %c0_4] : memref<1x128xf32, #tpu.memory_space<vmem>>, vector<1x128xf32>
    %4 = vector.broadcast %3 : vector<1x128xf32> to vector<8x128xf32>
    %5 = arith.addf %2, %4 : vector<8x128xf32>
    %c0_5 = arith.constant 0 : index
    %c0_6 = arith.constant 0 : index
    %6 = vector.load %arg4[%c0_5, %c0_6] : memref<8x128xf32, #tpu.memory_space<vmem>>, vector<8x128xf32>
    tpu.vector_store %arg4[%c0_5, %c0_6], %5 {strides = array<i32>} : memref<8x128xf32, #tpu.memory_space<vmem>>, vector<8x128xf32>,
    return
  }
  func.func @transform_0(%arg0: i32) -> (i32, i32) {
    %c0_i32 = arith.constant 0 : i32
    %c0_i32_0 = arith.constant 0 : i32
    return %arg0, %c0_i32 : i32, i32
  }
  func.func @transform_1(%arg0: i32) -> (i32, i32) {
    %c0_i32 = arith.constant 0 : i32
    %c0_i32_0 = arith.constant 0 : i32
    %c0_i32_1 = arith.constant 0 : i32
    return %c0_i32, %c0_i32_0 : i32, i32
  }
  func.func @transform_2(%arg0: i32) -> (i32, i32) {
    %c0_i32 = arith.constant 0 : i32
    %c0_i32_0 = arith.constant 0 : i32
    %c0_i32_1 = arith.constant 0 : i32
    return %c0_i32, %c0_i32_0 : i32, i32
  }
  func.func @transform_3(%arg0: i32) -> (i32, i32) {
    %c0_i32 = arith.constant 0 : i32
    %c0_i32_0 = arith.constant 0 : i32
    return %arg0, %c0_i32 : i32, i32
  }
}

</mosaic_0001>

<llo_original>
// kernel: tpu_custom_call.1
$region0: #{tpu_custom_call.1}
  #allocation0 [shape = 'u32[]', space=smem, size = 0x4, offset = 0x4, fixed_abs, tag = 'smem constant byte address 0x4 - core index']
  #allocation1 [shape = 'u32[144,128]{1,0:T(1,128)}', space=vmem, size = 0x12000, scoped, tag = 'internal scratch']
  %s0 = inlined_call_operand.hbm [shape: f32[8,512], index: 0, kind: input, shape index: {}]
  %s1 = inlined_call_operand.hbm [shape: f32[512,128], index: 1, kind: input, shape index: {}]
  %s2 = inlined_call_operand.vmem [shape: f32[1,128], index: 2, kind: input, shape index: {}]
  %s3 = inlined_call_operand.hbm [shape: f32[8,128], index: 3, kind: output, shape index: {}]
  %s4 = sld [smem:[#allocation0]]
  $region30: #{tpu_custom_call.1} parent=0
    _
  %s6 = ssub.s32 1, %s4
  %s7 = scalar_select 0, %s6, %s4
  $region1: #{tpu_custom_call.1} parent=0
    #allocation2 [shape = 'u8[16384]{0}', space=vmem, size = 0x4000, scoped, tag = 'input window, operand 0, single buffered']
    #allocation3 [shape = 's32[1]{0}', space=sflag, size = 0x4, scoped, tag = 'scoped memory for tpu_custom_call.1']
    #allocation4 [shape = 's32[1]{0}', space=sflag, size = 0x4, scoped, tag = 'scoped memory for tpu_custom_call.1']
    #allocation5 [shape = 'u8[262144]{0}', space=vmem, size = 0x40000, scoped, tag = 'input window, operand 1, single buffered']
    #allocation6 [shape = 's32[1]{0}', space=sflag, size = 0x4, scoped, tag = 'scoped memory for tpu_custom_call.1']
    #allocation7 [shape = 'u8[4096]{0}', space=vmem, size = 0x1000, scoped, tag = 'output window, operand 0, single buffered']
    %8 = vsyncpa [#allocation3], 0
    %9 = vsyncpa [#allocation6], 0
    %10 = vsyncpa [#allocation4], 0
    // Predicated region
    $region2: #{tpu_custom_call.1} parent=1 // pred_check
      _
    $region3: #{tpu_custom_call.1} parent=1 // pred_check_branch
      %12 = sbr.rel (0) target = $region5
    $region4: #{tpu_custom_call.1} parent=1 // pred_region
      %s14 = ssub.s32 512, 512
      %15 = vsyncadd [#allocation3], %s14
      %s17 = sshll.u32 [#allocation2], 4
      %s18 = int_to_ptr.vmem [resolvable:$true] %s17
      %20 = dma.hbm_to_vmem [thread:$0]  %s0, 512, %s18, [#allocation3]
    $region5: #{tpu_custom_call.1} parent=1 // pred_fallthru
      _
    // Predicated region
    $region6: #{tpu_custom_call.1} parent=1 // pred_check
      _
    $region7: #{tpu_custom_call.1} parent=1 // pred_check_branch
      %22 = sbr.rel (0) target = $region9
    $region8: #{tpu_custom_call.1} parent=1 // pred_region
      %s24 = ssub.s32 8192, 8192
      %25 = vsyncadd [#allocation6], %s24
      %s26 = sshll.u32 [#allocation5], 4
      %s27 = int_to_ptr.vmem [resolvable:$true] %s26
      %32 = dma.hbm_to_vmem [thread:$0]  %s1, 8192, %s27, [#allocation6], 128, 128, 8
    $region9: #{tpu_custom_call.1} parent=1 // pred_fallthru
      _
    // Predicated region
    $region10: #{tpu_custom_call.1} parent=1 // pred_check
      _
    $region11: #{tpu_custom_call.1} parent=1 // pred_check_branch
      %34 = sbr.rel (0) target = $region13
    $region12: #{tpu_custom_call.1} parent=1 // pred_region
      _
    $region13: #{tpu_custom_call.1} parent=1 // pred_fallthru
      _
    // Predicated region
    $region14: #{tpu_custom_call.1} parent=1 // pred_check
      _
    $region15: #{tpu_custom_call.1} parent=1 // pred_check_branch
      %36 = sbr.rel (0) target = $region17
    $region16: #{tpu_custom_call.1} parent=1 // pred_region
      %37 = dma.done [#allocation3], 512
    $region17: #{tpu_custom_call.1} parent=1 // pred_fallthru
      _
    // Predicated region
    $region18: #{tpu_custom_call.1} parent=1 // pred_check
      _
    $region19: #{tpu_custom_call.1} parent=1 // pred_check_branch
      %39 = sbr.rel (0) target = $region21
    $region20: #{tpu_custom_call.1} parent=1 // pred_region
      %40 = dma.done [#allocation6], 8192
    $region21: #{tpu_custom_call.1} parent=1 // pred_fallthru
      _
    %v41 = vld [vmem:[#allocation2] sm:$0xff]
    %v42 = vld [vmem:[#allocation2 + $0x8] sm:$0xff]
    %v43 = vld [vmem:[#allocation2 + $0x10] sm:$0xff]
    %v44 = vld [vmem:[#allocation2 + $0x18] sm:$0xff]
    %v45 = vld [vmem:[#allocation5] sm:$0xff]
    %v46 = vld [vmem:[#allocation5 + $0x8] sm:$0xff]
    %v47 = vld [vmem:[#allocation5 + $0x10] sm:$0xff]
    %v48 = vld [vmem:[#allocation5 + $0x18] sm:$0xff]
    %v49 = vld [vmem:[#allocation5 + $0x20] sm:$0xff]
    %v50 = vld [vmem:[#allocation5 + $0x28] sm:$0xff]
    %v51 = vld [vmem:[#allocation5 + $0x30] sm:$0xff]
    %v52 = vld [vmem:[#allocation5 + $0x38] sm:$0xff]
    %v53 = vld [vmem:[#allocation5 + $0x40] sm:$0xff]
    %v54 = vld [vmem:[#allocation5 + $0x48] sm:$0xff]
    %v55 = vld [vmem:[#allocation5 + $0x50] sm:$0xff]
    %v56 = vld [vmem:[#allocation5 + $0x58] sm:$0xff]
    %v57 = vld [vmem:[#allocation5 + $0x60] sm:$0xff]
    %v58 = vld [vmem:[#allocation5 + $0x68] sm:$0xff]
    %v59 = vld [vmem:[#allocation5 + $0x70] sm:$0xff]
    %v60 = vld [vmem:[#allocation5 + $0x78] sm:$0xff]
    %v61 = vld [vmem:[#allocation5 + $0x80] sm:$0xff]
    %v62 = vld [vmem:[#allocation5 + $0x88] sm:$0xff]
    %v63 = vld [vmem:[#allocation5 + $0x90] sm:$0xff]
    %v64 = vld [vmem:[#allocation5 + $0x98] sm:$0xff]
    %v65 = vld [vmem:[#allocation5 + $0xa0] sm:$0xff]
    %v66 = vld [vmem:[#allocation5 + $0xa8] sm:$0xff]
    %v67 = vld [vmem:[#allocation5 + $0xb0] sm:$0xff]
    %v68 = vld [vmem:[#allocation5 + $0xb8] sm:$0xff]
    %v69 = vld [vmem:[#allocation5 + $0xc0] sm:$0xff]
    %v70 = vld [vmem:[#allocation5 + $0xc8] sm:$0xff]
    %v71 = vld [vmem:[#allocation5 + $0xd0] sm:$0xff]
    %v72 = vld [vmem:[#allocation5 + $0xd8] sm:$0xff]
    %v73 = vld [vmem:[#allocation5 + $0xe0] sm:$0xff]
    %v74 = vld [vmem:[#allocation5 + $0xe8] sm:$0xff]
    %v75 = vld [vmem:[#allocation5 + $0xf0] sm:$0xff]
    %v76 = vld [vmem:[#allocation5 + $0xf8] sm:$0xff]
    %v77 = vld [vmem:[#allocation5 + $0x100] sm:$0xff]
    %v78 = vld [vmem:[#allocation5 + $0x108] sm:$0xff]
    %v79 = vld [vmem:[#allocation5 + $0x110] sm:$0xff]
    %v80 = vld [vmem:[#allocation5 + $0x118] sm:$0xff]
    %v81 = vld [vmem:[#allocation5 + $0x120] sm:$0xff]
    %v82 = vld [vmem:[#allocation5 + $0x128] sm:$0xff]
    %v83 = vld [vmem:[#allocation5 + $0x130] sm:$0xff]
    %v84 = vld [vmem:[#allocation5 + $0x138] sm:$0xff]
    %v85 = vld [vmem:[#allocation5 + $0x140] sm:$0xff]
    %v86 = vld [vmem:[#allocation5 + $0x148] sm:$0xff]
    %v87 = vld [vmem:[#allocation5 + $0x150] sm:$0xff]
    %v88 = vld [vmem:[#allocation5 + $0x158] sm:$0xff]
    %v89 = vld [vmem:[#allocation5 + $0x160] sm:$0xff]
    %v90 = vld [vmem:[#allocation5 + $0x168] sm:$0xff]
    %v91 = vld [vmem:[#allocation5 + $0x170] sm:$0xff]
    %v92 = vld [vmem:[#allocation5 + $0x178] sm:$0xff]
    %v93 = vld [vmem:[#allocation5 + $0x180] sm:$0xff]
    %v94 = vld [vmem:[#allocation5 + $0x188] sm:$0xff]
    %v95 = vld [vmem:[#allocation5 + $0x190] sm:$0xff]
    %v96 = vld [vmem:[#allocation5 + $0x198] sm:$0xff]
    %v97 = vld [vmem:[#allocation5 + $0x1a0] sm:$0xff]
    %v98 = vld [vmem:[#allocation5 + $0x1a8] sm:$0xff]
    %v99 = vld [vmem:[#allocation5 + $0x1b0] sm:$0xff]
    %v100 = vld [vmem:[#allocation5 + $0x1b8] sm:$0xff]
    %v101 = vld [vmem:[#allocation5 + $0x1c0] sm:$0xff]
    %v102 = vld [vmem:[#allocation5 + $0x1c8] sm:$0xff]
    %v103 = vld [vmem:[#allocation5 + $0x1d0] sm:$0xff]
    %v104 = vld [vmem:[#allocation5 + $0x1d8] sm:$0xff]
    %v105 = vld [vmem:[#allocation5 + $0x1e0] sm:$0xff]
    %v106 = vld [vmem:[#allocation5 + $0x1e8] sm:$0xff]
    %v107 = vld [vmem:[#allocation5 + $0x1f0] sm:$0xff]
    %v108 = vld [vmem:[#allocation5 + $0x1f8] sm:$0xff]
    %v109 = vld [vmem:[%s2] sm:$0x1]
    %v111 = vlaneseq
    %v112 = vshrl.u32 %v111, 7
    %v113 = vsub.s32 0, %v112
    %v114 = vrot.slane %v109, %v113
    %116 = vmatprep.subr.mxu0 0.0
    %117 = vmatpush1.msra.mxu0 %v45
    %118 = vmatprep.subr.mxu0 0.0
    %119 = vmatpush1.msra.mxu0 %v46
    %120 = vmatprep.subr.mxu0 0.0
    %121 = vmatpush1.msra.mxu0 %v47
    %122 = vmatprep.subr.mxu0 0.0
    %123 = vmatpush1.msra.mxu0 %v48
    %124 = vmatprep.subr.mxu0 0.0
    %125 = vmatpush1.msra.mxu0 %v49
    %126 = vmatprep.subr.mxu0 0.0
    %127 = vmatpush1.msra.mxu0 %v50
    %128 = vmatprep.subr.mxu0 0.0
    %129 = vmatpush1.msra.mxu0 %v51
    %130 = vmatprep.subr.mxu0 0.0
    %131 = vmatpush1.msra.mxu0 %v52
    %132 = vmatprep.subr.mxu0 0.0
    %133 = vmatpush1.msra.mxu0 %v53
    %134 = vmatprep.subr.mxu0 0.0
    %135 = vmatpush1.msra.mxu0 %v54
    %136 = vmatprep.subr.mxu0 0.0
    %137 = vmatpush1.msra.mxu0 %v55
    %138 = vmatprep.subr.mxu0 0.0
    %139 = vmatpush1.msra.mxu0 %v56
    %140 = vmatprep.subr.mxu0 0.0
    %141 = vmatpush1.msra.mxu0 %v57
    %142 = vmatprep.subr.mxu0 0.0
    %143 = vmatpush1.msra.mxu0 %v58
    %144 = vmatprep.subr.mxu0 0.0
    %145 = vmatpush1.msra.mxu0 %v59
    %146 = vmatprep.subr.mxu0 0.0
    %147 = vmatpush1.msra.mxu0 %v60
    %148 = vmatprep.subr.mxu0 0.0
    %149 = vmatpush1.msra.mxu0 %v61
    %150 = vmatprep.subr.mxu0 0.0
    %151 = vmatpush1.msra.mxu0 %v62
    %152 = vmatprep.subr.mxu0 0.0
    %153 = vmatpush1.msra.mxu0 %v63
    %154 = vmatprep.subr.mxu0 0.0
    %155 = vmatpush1.msra.mxu0 %v64
    %156 = vmatprep.subr.mxu0 0.0
    %157 = vmatpush1.msra.mxu0 %v65
    %158 = vmatprep.subr.mxu0 0.0
    %159 = vmatpush1.msra.mxu0 %v66
    %160 = vmatprep.subr.mxu0 0.0
    %161 = vmatpush1.msra.mxu0 %v67
    %162 = vmatprep.subr.mxu0 0.0
    %163 = vmatpush1.msra.mxu0 %v68
    %164 = vmatprep.subr.mxu0 0.0
    %165 = vmatpush1.msra.mxu0 %v69
    %166 = vmatprep.subr.mxu0 0.0
    %167 = vmatpush1.msra.mxu0 %v70
    %168 = vmatprep.subr.mxu0 0.0
    %169 = vmatpush1.msra.mxu0 %v71
    %170 = vmatprep.subr.mxu0 0.0
    %171 = vmatpush1.msra.mxu0 %v72
    %172 = vmatprep.subr.mxu0 0.0
    %173 = vmatpush1.msra.mxu0 %v73
    %174 = vmatprep.subr.mxu0 0.0
    %175 = vmatpush1.msra.mxu0 %v74
    %176 = vmatprep.subr.mxu0 0.0
    %177 = vmatpush1.msra.mxu0 %v75
    %178 = vmatprep.subr.mxu0 0.0
    %179 = vmatpush1.msra.mxu0 %v76
    %180 = vmatprep.mubr.f32.mxu0 %v42
    %181 = vmatmul.mubr.f32.gmra.mrb[0].mxu0 %v41
    %v182 = vpop.f32.mrb[0].mxu0
    %v183 = vadd.f32 %v114, %v182
    %v184 = vpop.f32.mrb[0].mxu0
    %185 = vdwg.mxu0
    %186 = vmatprep.subr.mxu0 0.0
    %187 = vmatpush1.msra.mxu0 %v77
    %188 = vmatprep.subr.mxu0 0.0
    %189 = vmatpush1.msra.mxu0 %v78
    %190 = vmatprep.subr.mxu0 0.0
    %191 = vmatpush1.msra.mxu0 %v79
    %192 = vmatprep.subr.mxu0 0.0
    %193 = vmatpush1.msra.mxu0 %v80
    %194 = vmatprep.subr.mxu0 0.0
    %195 = vmatpush1.msra.mxu0 %v81
    %196 = vmatprep.subr.mxu0 0.0
    %197 = vmatpush1.msra.mxu0 %v82
    %198 = vmatprep.subr.mxu0 0.0
    %199 = vmatpush1.msra.mxu0 %v83
    %200 = vmatprep.subr.mxu0 0.0
    %201 = vmatpush1.msra.mxu0 %v84
    %202 = vmatprep.subr.mxu0 0.0
    %203 = vmatpush1.msra.mxu0 %v85
    %204 = vmatprep.subr.mxu0 0.0
    %205 = vmatpush1.msra.mxu0 %v86
    %206 = vmatprep.subr.mxu0 0.0
    %207 = vmatpush1.msra.mxu0 %v87
    %208 = vmatprep.subr.mxu0 0.0
    %209 = vmatpush1.msra.mxu0 %v88
    %210 = vmatprep.subr.mxu0 0.0
    %211 = vmatpush1.msra.mxu0 %v89
    %212 = vmatprep.subr.mxu0 0.0
    %213 = vmatpush1.msra.mxu0 %v90
    %214 = vmatprep.subr.mxu0 0.0
    %215 = vmatpush1.msra.mxu0 %v91
    %216 = vmatprep.subr.mxu0 0.0
    %217 = vmatpush1.msra.mxu0 %v92
    %218 = vmatprep.subr.mxu0 0.0
    %219 = vmatpush1.msra.mxu0 %v93
    %220 = vmatprep.subr.mxu0 0.0
    %221 = vmatpush1.msra.mxu0 %v94
    %222 = vmatprep.subr.mxu0 0.0
    %223 = vmatpush1.msra.mxu0 %v95
    %224 = vmatprep.subr.mxu0 0.0
    %225 = vmatpush1.msra.mxu0 %v96
    %226 = vmatprep.subr.mxu0 0.0
    %227 = vmatpush1.msra.mxu0 %v97
    %228 = vmatprep.subr.mxu0 0.0
    %229 = vmatpush1.msra.mxu0 %v98
    %230 = vmatprep.subr.mxu0 0.0
    %231 = vmatpush1.msra.mxu0 %v99
    %232 = vmatprep.subr.mxu0 0.0
    %233 = vmatpush1.msra.mxu0 %v100
    %234 = vmatprep.subr.mxu0 0.0
    %235 = vmatpush1.msra.mxu0 %v101
    %236 = vmatprep.subr.mxu0 0.0
    %237 = vmatpush1.msra.mxu0 %v102
    %238 = vmatprep.subr.mxu0 0.0
    %239 = vmatpush1.msra.mxu0 %v103
    %240 = vmatprep.subr.mxu0 0.0
    %241 = vmatpush1.msra.mxu0 %v104
    %242 = vmatprep.subr.mxu0 0.0
    %243 = vmatpush1.msra.mxu0 %v105
    %244 = vmatprep.subr.mxu0 0.0
    %245 = vmatpush1.msra.mxu0 %v106
    %246 = vmatprep.subr.mxu0 0.0
    %247 = vmatpush1.msra.mxu0 %v107
    %248 = vmatprep.subr.mxu0 0.0
    %249 = vmatpush1.msra.mxu0 %v108
    %250 = vmatprep.mubr.f32.mxu0 %v44
    %251 = vmatmul.mubr.f32.gmra.mrb[0].mxu0 %v43
    %v252 = vpop.f32.mrb[0].mxu0
    %v253 = vadd.f32 %v183, %v252
    %v254 = vpop.f32.mrb[0].mxu0
    %255 = vdwg.mxu0
    %256 = vst [vmem:[#allocation7] sm:$0xff] %v253
    // Predicated region
    $region22: #{tpu_custom_call.1} parent=1 // pred_check
      _
    $region23: #{tpu_custom_call.1} parent=1 // pred_check_branch
      %258 = sbr.rel (0) target = $region25
    $region24: #{tpu_custom_call.1} parent=1 // pred_region
      %s260 = ssub.s32 128, 128
      %261 = vsyncadd [#allocation4], %s260
      %s263 = sshll.u32 [#allocation7], 4
      %s264 = int_to_ptr.vmem [resolvable:$true] %s263
      %266 = dma.vmem_to_hbm [thread:$0]  %s264, 128, %s3, [#allocation4]
    $region25: #{tpu_custom_call.1} parent=1 // pred_fallthru
      _
    // Predicated region
    $region26: #{tpu_custom_call.1} parent=1 // pred_check
      _
    $region27: #{tpu_custom_call.1} parent=1 // pred_check_branch
      %268 = sbr.rel (0) target = $region29
    $region28: #{tpu_custom_call.1} parent=1 // pred_region
      %269 = dma.done [#allocation4], 128
    $region29: #{tpu_custom_call.1} parent=1 // pred_fallthru
      _
    %270 = vsyncpa [#allocation3], 1
    %271 = vsyncpa [#allocation6], 1
    %272 = vsyncpa [#allocation4], 1

</llo_original>
